<compile_context>
chip_gen: v6e
topology: v6e:2x2x1
jax: 0.10.0
libtpu: 0.0.40
codegen_flags: <defaults>
</compile_context>

<pallas_src>
import math

import jax
import jax.numpy as jnp
from jax.experimental import pallas as pl
from jax.experimental.pallas import tpu as pltpu


def concat_linear_kernel(x1_ref, x3_ref, w1_ref, w3_ref, b_ref, o_ref):
    # x1_ref: (tb, F1), x3_ref: (tb, F3), w1_ref: (F1, C), w3_ref: (F3, C),
    # b_ref: (1, C), o_ref: (tb, C)
    #
    # Split matmul == matmul of the concatenation; no concat materialized.
    acc = jnp.dot(x1_ref[...], w1_ref[...], preferred_element_type=jnp.float32)
    acc = acc + jnp.dot(x3_ref[...], w3_ref[...], preferred_element_type=jnp.float32)
    # (1, C) broadcast bias add, single store, no epilogue.
    o_ref[...] = (acc + b_ref[...]).astype(o_ref.dtype)


def _round_up(x, m):
    return ((x + m - 1) // m) * m


# 8192-row cap: 8192 x (32+32) f32 x 2 inputs x 2 pipeline buffers ~= 4.3 MiB
# of activation blocks -- safely below v5e's 16 MiB scoped-VMEM default (and
# trivially below v6e/v7x limits), while each grid step streams ~2 MiB so the
# ~0.35 us fixed per-step overhead is <20% of step time.
_TILE_CAP = 8192


def _pick_batch_tile(B):
    if B < 8:
        # Tiny batch: single full-dim block (block dim == array dim is legal).
        return B
    # Aim for >= ~4 grid steps (so v7x megacore has >= 2 steps per core),
    # sublane-aligned (multiple of 8), capped for VMEM headroom.
    return min(_TILE_CAP, _round_up(pl.cdiv(B, 4), 8))


def concat_forward(x1_feat, x3_flat, w_t, b):
    """x1_feat: (B, F1), x3_flat: (B, F3), w_t: (F1+F3, C), b: (C,)."""
    B, F1 = x1_feat.shape
    F3 = x3_flat.shape[1]
    C = w_t.shape[1]

    # Split the weight once at trace time (free) so the kernel never
    # concatenates along the lane axis.
    w1 = w_t[:F1, :]                 # (F1, C)
    w3 = w_t[F1:, :]                 # (F3, C)
    b2d = b.reshape(1, C)            # (1, C) for broadcast add in kernel

    tile_b = _pick_batch_tile(B)
    grid = (pl.cdiv(B, tile_b),)     # ragged last block handled by Pallas

    return pl.pallas_call(
        concat_linear_kernel,
        out_shape=jax.ShapeDtypeStruct((B, C), jnp.float32),
        grid=grid,
        in_specs=[
            # Activation streams: tiled over batch, double-buffered per step.
            pl.BlockSpec((tile_b, F1), lambda i: (i, 0)),
            pl.BlockSpec((tile_b, F3), lambda i: (i, 0)),
            # Weights / bias: same block every step -> stay resident in VMEM.
            pl.BlockSpec((F1, C), lambda i: (0, 0)),
            pl.BlockSpec((F3, C), lambda i: (0, 0)),
            pl.BlockSpec((1, C), lambda i: (0, 0)),
        ],
        out_specs=pl.BlockSpec((tile_b, C), lambda i: (i, 0)),
        compiler_params=pltpu.CompilerParams(
            dimension_semantics=("parallel",),   # megacore sharding on v7x
        ),
    )(x1_feat, x3_flat, w1, w3, b2d)


# ----- deterministic stand-ins for the injected submodules (plain JAX glue) ---
def model_image_fwd(x1):
    # Stand-in: already produces (B, F1) feature vectors.
    return x1


def model_gens_fwd(x3):
    # Stand-in: identity; flattening happens in the wrapper (x3.view(B, -1)).
    return x3


def concat_module_forward(x1, x3, w_t, b):
    x1f = model_image_fwd(x1)                       # (B, F1)
    x3f = model_gens_fwd(x3)
    x3f = x3f.reshape(x3f.shape[0], -1)             # (B, F3)  == x3.view(B, -1)
    return concat_forward(x1f, x3f, w_t, b)         # fused concat + Linear(64, 3)


if __name__ == "__main__":
    F1 = 32          # model_image feature width
    F3 = 32          # model_gens flattened feature width (4 * 8)
    NB_CLASSES = 3

    key = jax.random.PRNGKey(0)
    k_x1, k_x3, k_w, k_b, k_y1, k_y3 = jax.random.split(key, 6)

    # Deterministic Linear(64, 3) params (PyTorch default init bounds)
    bound = 1.0 / math.sqrt(F1 + F3)
    w = jax.random.uniform(k_w, (NB_CLASSES, F1 + F3), jnp.float32, -bound, bound)
    b = jax.random.uniform(k_b, (NB_CLASSES,), jnp.float32, -bound, bound)

    # --- small-batch case exactly matching the module's typical forward -----
    B = 2
    x1 = jax.random.normal(k_x1, (B, F1), dtype=jnp.float32)       # image features
    x3 = jax.random.normal(k_x3, (B, 4, 8), dtype=jnp.float32)     # gens output -> flattens to 32

    out = concat_module_forward(x1, x3, w.T, b)
    out = jax.block_until_ready(out)

    ref = jnp.concatenate([x1, x3.reshape(B, -1)], axis=1) @ w.T + b
    assert out.shape == (B, NB_CLASSES)
    assert jnp.allclose(out, ref, atol=1e-5, rtol=1e-5)

    # --- larger, non-multiple-of-8 batch: exercises the cdiv grid / ragged
    #     last block path fixed in this revision (tile_b=256, grid=4) ---------
    B2 = 1000
    y1 = jax.random.normal(k_y1, (B2, F1), dtype=jnp.float32)
    y3 = jax.random.normal(k_y3, (B2, 4, 8), dtype=jnp.float32)

    out2 = concat_module_forward(y1, y3, w.T, b)
    out2 = jax.block_until_ready(out2)

    ref2 = jnp.concatenate([y1, y3.reshape(B2, -1)], axis=1) @ w.T + b
    assert out2.shape == (B2, NB_CLASSES)
    assert jnp.allclose(out2, ref2, atol=1e-5, rtol=1e-5)

    print("KERNEL_OK")
</pallas_src>

<mosaic_0001>
module attributes {stable_mosaic.version = 11 : i64} {
  func.func @concat_linear_kernel(%arg0: i32, %arg1: memref<2x32xf32, #tpu.memory_space<vmem>>, %arg2: memref<2x32xf32, #tpu.memory_space<vmem>>, %arg3: memref<32x3xf32, #tpu.memory_space<vmem>>, %arg4: memref<32x3xf32, #tpu.memory_space<vmem>>, %arg5: memref<1x3xf32, #tpu.memory_space<vmem>>, %arg6: memref<2x3xf32, #tpu.memory_space<vmem>>) attributes {dimension_semantics = [#tpu.dimension_semantics<parallel>], iteration_bounds = array<i64: 1>, scalar_prefetch = 0 : i64, scratch_operands = 0 : i64, tpu.core_type = #tpu.core_type<tc>, window_params = [{transform_indices = @transform_0, window_bounds = array<i64: 2, 32>}, {transform_indices = @transform_1, window_bounds = array<i64: 2, 32>}, {pipeline_mode = #tpu.pipeline_mode<synchronous>, transform_indices = @transform_2, window_bounds = array<i64: 32, 3>}, {pipeline_mode = #tpu.pipeline_mode<synchronous>, transform_indices = @transform_3, window_bounds = array<i64: 32, 3>}, {pipeline_mode = #tpu.pipeline_mode<synchronous>, transform_indices = @transform_4, window_bounds = array<i64: 1, 3>}, {transform_indices = @transform_5, window_bounds = array<i64: 2, 3>}]} {
    %c0 = arith.constant 0 : index
    %c0_0 = arith.constant 0 : index
    %0 = vector.load %arg1[%c0, %c0_0] : memref<2x32xf32, #tpu.memory_space<vmem>>, vector<2x32xf32>
    %c0_1 = arith.constant 0 : index
    %c0_2 = arith.constant 0 : index
    %1 = vector.load %arg3[%c0_1, %c0_2] : memref<32x3xf32, #tpu.memory_space<vmem>>, vector<32x3xf32>
    %cst = arith.constant dense<0.000000e+00> : vector<2x3xf32>
    %2 = tpu.matmul %0, %1, %cst {dimension_numbers = #tpu.dot_dimension_numbers<[1], [0], [0], [1], [0, 0, 1, 1], [], []>} : vector<2x32xf32>, vector<32x3xf32>, vector<2x3xf32> -> vector<2x3xf32>
    %c0_3 = arith.constant 0 : index
    %c0_4 = arith.constant 0 : index
    %3 = vector.load %arg2[%c0_3, %c0_4] : memref<2x32xf32, #tpu.memory_space<vmem>>, vector<2x32xf32>
    %c0_5 = arith.constant 0 : index
    %c0_6 = arith.constant 0 : index
    %4 = vector.load %arg4[%c0_5, %c0_6] : memref<32x3xf32, #tpu.memory_space<vmem>>, vector<32x3xf32>
    %cst_7 = arith.constant dense<0.000000e+00> : vector<2x3xf32>
    %5 = tpu.matmul %3, %4, %cst_7 {dimension_numbers = #tpu.dot_dimension_numbers<[1], [0], [0], [1], [0, 0, 1, 1], [], []>} : vector<2x32xf32>, vector<32x3xf32>, vector<2x3xf32> -> vector<2x3xf32>
    %6 = arith.addf %2, %5 : vector<2x3xf32>
    %c0_8 = arith.constant 0 : index
    %c0_9 = arith.constant 0 : index
    %7 = vector.load %arg5[%c0_8, %c0_9] : memref<1x3xf32, #tpu.memory_space<vmem>>, vector<1x3xf32>
    %8 = vector.broadcast %7 : vector<1x3xf32> to vector<2x3xf32>
    %9 = arith.addf %6, %8 : vector<2x3xf32>
    %c0_10 = arith.constant 0 : index
    %c0_11 = arith.constant 0 : index
    %10 = vector.load %arg6[%c0_10, %c0_11] : memref<2x3xf32, #tpu.memory_space<vmem>>, vector<2x3xf32>
    tpu.vector_store %arg6[%c0_10, %c0_11], %9 {strides = array<i32>} : memref<2x3xf32, #tpu.memory_space<vmem>>, vector<2x3xf32>,
    return
  }
  func.func @transform_0(%arg0: i32) -> (i32, i32) {
    %c0_i32 = arith.constant 0 : i32
    %c0_i32_0 = arith.constant 0 : i32
    return %arg0, %c0_i32 : i32, i32
  }
  func.func @transform_1(%arg0: i32) -> (i32, i32) {
    %c0_i32 = arith.constant 0 : i32
    %c0_i32_0 = arith.constant 0 : i32
    return %arg0, %c0_i32 : i32, i32
  }
  func.func @transform_2(%arg0: i32) -> (i32, i32) {
    %c0_i32 = arith.constant 0 : i32
    %c0_i32_0 = arith.constant 0 : i32
    %c0_i32_1 = arith.constant 0 : i32
    return %c0_i32, %c0_i32_0 : i32, i32
  }
  func.func @transform_3(%arg0: i32) -> (i32, i32) {
    %c0_i32 = arith.constant 0 : i32
    %c0_i32_0 = arith.constant 0 : i32
    %c0_i32_1 = arith.constant 0 : i32
    return %c0_i32, %c0_i32_0 : i32, i32
  }
  func.func @transform_4(%arg0: i32) -> (i32, i32) {
    %c0_i32 = arith.constant 0 : i32
    %c0_i32_0 = arith.constant 0 : i32
    %c0_i32_1 = arith.constant 0 : i32
    return %c0_i32, %c0_i32_0 : i32, i32
  }
  func.func @transform_5(%arg0: i32) -> (i32, i32) {
    %c0_i32 = arith.constant 0 : i32
    %c0_i32_0 = arith.constant 0 : i32
    return %arg0, %c0_i32 : i32, i32
  }
}

</mosaic_0001>

<llo_original>
// kernel: tpu_custom_call.1
$region0: #{tpu_custom_call.1}
  #allocation0 [shape = 'u32[]', space=smem, size = 0x4, offset = 0x4, fixed_abs, tag = 'smem constant byte address 0x4 - core index']
  #allocation1 [shape = 'u32[144,128]{1,0:T(1,128)}', space=vmem, size = 0x12000, scoped, tag = 'internal scratch']
  %s0 = inlined_call_operand.vmem [shape: f32[2,32], index: 0, kind: input, shape index: {}]
  %s1 = inlined_call_operand.vmem [shape: f32[2,32], index: 1, kind: input, shape index: {}]
  %s2 = inlined_call_operand.vmem [shape: f32[32,3], index: 2, kind: input, shape index: {}]
  %s3 = inlined_call_operand.vmem [shape: f32[32,3], index: 3, kind: input, shape index: {}]
  %s4 = inlined_call_operand.vmem [shape: f32[1,3], index: 4, kind: input, shape index: {}]
  %s5 = inlined_call_operand.hbm [shape: f32[2,3], index: 5, kind: output, shape index: {}]
  %s6 = sld [smem:[#allocation0]]
  $region30: #{tpu_custom_call.1} parent=0
    _
  %s8 = ssub.s32 1, %s6
  %s9 = scalar_select 0, %s8, %s6
  $region1: #{tpu_custom_call.1} parent=0
    #allocation2 [shape = 'u8[1024]{0}', space=vmem, size = 0x400, scoped, tag = 'output window, operand 0, single buffered']
    #allocation3 [shape = 's32[1]{0}', space=sflag, size = 0x4, scoped, tag = 'scoped memory for tpu_custom_call.1']
    %10 = vsyncpa [#allocation3], 0
    // Predicated region
    $region2: #{tpu_custom_call.1} parent=1 // pred_check
      _
    $region3: #{tpu_custom_call.1} parent=1 // pred_check_branch
      %12 = sbr.rel (0) target = $region5
    $region4: #{tpu_custom_call.1} parent=1 // pred_region
      _
    $region5: #{tpu_custom_call.1} parent=1 // pred_fallthru
      _
    // Predicated region
    $region6: #{tpu_custom_call.1} parent=1 // pred_check
      _
    $region7: #{tpu_custom_call.1} parent=1 // pred_check_branch
      %14 = sbr.rel (0) target = $region9
    $region8: #{tpu_custom_call.1} parent=1 // pred_region
      _
    $region9: #{tpu_custom_call.1} parent=1 // pred_fallthru
      _
    // Predicated region
    $region10: #{tpu_custom_call.1} parent=1 // pred_check
      _
    $region11: #{tpu_custom_call.1} parent=1 // pred_check_branch
      %16 = sbr.rel (0) target = $region13
    $region12: #{tpu_custom_call.1} parent=1 // pred_region
      _
    $region13: #{tpu_custom_call.1} parent=1 // pred_fallthru
      _
    // Predicated region
    $region14: #{tpu_custom_call.1} parent=1 // pred_check
      _
    $region15: #{tpu_custom_call.1} parent=1 // pred_check_branch
      %18 = sbr.rel (0) target = $region17
    $region16: #{tpu_custom_call.1} parent=1 // pred_region
      _
    $region17: #{tpu_custom_call.1} parent=1 // pred_fallthru
      _
    // Predicated region
    $region18: #{tpu_custom_call.1} parent=1 // pred_check
      _
    $region19: #{tpu_custom_call.1} parent=1 // pred_check_branch
      %20 = sbr.rel (0) target = $region21
    $region20: #{tpu_custom_call.1} parent=1 // pred_region
      _
    $region21: #{tpu_custom_call.1} parent=1 // pred_fallthru
      _
    %v21 = vld [vmem:[%s0] sm:$0x3]
    %v22 = vld [vmem:[%s2] sm:$0xff]
    %v23 = vld [vmem:[%s2 + $0x8] sm:$0xff]
    %v24 = vld [vmem:[%s2 + $0x10] sm:$0xff]
    %v25 = vld [vmem:[%s2 + $0x18] sm:$0xff]
    %v26 = vld [vmem:[%s1] sm:$0x3]
    %v27 = vld [vmem:[%s3] sm:$0xff]
    %v28 = vld [vmem:[%s3 + $0x8] sm:$0xff]
    %v29 = vld [vmem:[%s3 + $0x10] sm:$0xff]
    %v30 = vld [vmem:[%s3 + $0x18] sm:$0xff]
    %vm31 = vcmask 261120
    %v33 = vsel %vm31, %v26, 0
    %35 = vmatprep.subr.mxu0 0.0
    %36 = vmatpush1.msra.mxu0 0.0
    %37 = vmatprep.subr.mxu0 0.0
    %38 = vmatpush1.msra.mxu0 0.0
    %39 = vmatprep.subr.mxu0 0.0
    %40 = vmatpush1.msra.mxu0 0.0
    %41 = vmatprep.subr.mxu0 0.0
    %42 = vmatpush1.msra.mxu0 0.0
    %43 = vmatprep.subr.mxu0 0.0
    %44 = vmatpush1.msra.mxu0 0.0
    %45 = vmatprep.subr.mxu0 0.0
    %46 = vmatpush1.msra.mxu0 0.0
    %47 = vmatprep.subr.mxu0 0.0
    %48 = vmatpush1.msra.mxu0 0.0
    %49 = vmatprep.subr.mxu0 0.0
    %50 = vmatpush1.msra.mxu0 0.0
    %51 = vmatprep.subr.mxu0 0.0
    %52 = vmatpush1.msra.mxu0 0.0
    %53 = vmatprep.subr.mxu0 0.0
    %54 = vmatpush1.msra.mxu0 0.0
    %55 = vmatprep.subr.mxu0 0.0
    %56 = vmatpush1.msra.mxu0 0.0
    %57 = vmatprep.subr.mxu0 0.0
    %58 = vmatpush1.msra.mxu0 0.0
    %59 = vmatprep.subr.mxu0 0.0
    %60 = vmatpush1.msra.mxu0 %v30
    %61 = vmatprep.subr.mxu0 0.0
    %62 = vmatpush1.msra.mxu0 %v29
    %63 = vmatprep.subr.mxu0 0.0
    %64 = vmatpush1.msra.mxu0 %v28
    %65 = vmatprep.subr.mxu0 0.0
    %66 = vmatpush1.msra.mxu0 %v27
    %67 = vmatprep.subr.mxu0 0.0
    %68 = vmatpush2.msra.mxu0 0.0
    %69 = vmatprep.subr.mxu0 0.0
    %70 = vmatpush2.msra.mxu0 0.0
    %71 = vmatprep.subr.mxu0 0.0
    %72 = vmatpush2.msra.mxu0 0.0
    %73 = vmatprep.subr.mxu0 0.0
    %74 = vmatpush2.msra.mxu0 0.0
    %75 = vmatprep.subr.mxu0 0.0
    %76 = vmatpush2.msra.mxu0 0.0
    %77 = vmatprep.subr.mxu0 0.0
    %78 = vmatpush2.msra.mxu0 0.0
    %79 = vmatprep.subr.mxu0 0.0
    %80 = vmatpush2.msra.mxu0 0.0
    %81 = vmatprep.subr.mxu0 0.0
    %82 = vmatpush2.msra.mxu0 0.0
    %83 = vmatprep.subr.mxu0 0.0
    %84 = vmatpush2.msra.mxu0 0.0
    %85 = vmatprep.subr.mxu0 0.0
    %86 = vmatpush2.msra.mxu0 0.0
    %87 = vmatprep.subr.mxu0 0.0
    %88 = vmatpush2.msra.mxu0 0.0
    %89 = vmatprep.subr.mxu0 0.0
    %90 = vmatpush2.msra.mxu0 0.0
    %91 = vmatprep.subr.mxu0 0.0
    %92 = vmatpush2.msra.mxu0 0.0
    %93 = vmatprep.subr.mxu0 0.0
    %94 = vmatpush2.msra.mxu0 0.0
    %95 = vmatprep.subr.mxu0 0.0
    %96 = vmatpush2.msra.mxu0 0.0
    %97 = vmatprep.subr.mxu0 0.0
    %98 = vmatpush2.msra.mxu0 0.0
    %99 = vmatprep.mubr.f32.mxu0 0.0
    %100 = vmatmul.mubr.f32.gmra.mxu0 %v33
    %v101 = vpop.f32.mrf.mxu0
    %v102 = vadd.f32 0.0, %v101
    %v103 = vpop.f32.mrf.mxu0
    %104 = vdwg.mxu0
    %v106 = vsel %vm31, %v21, 0
    %108 = vmatprep.subr.mxu0 0.0
    %109 = vmatpush1.msra.mxu0 0.0
    %110 = vmatprep.subr.mxu0 0.0
    %111 = vmatpush1.msra.mxu0 0.0
    %112 = vmatprep.subr.mxu0 0.0
    %113 = vmatpush1.msra.mxu0 0.0
    %114 = vmatprep.subr.mxu0 0.0
    %115 = vmatpush1.msra.mxu0 0.0
    %116 = vmatprep.subr.mxu0 0.0
    %117 = vmatpush1.msra.mxu0 0.0
    %118 = vmatprep.subr.mxu0 0.0
    %119 = vmatpush1.msra.mxu0 0.0
    %120 = vmatprep.subr.mxu0 0.0
    %121 = vmatpush1.msra.mxu0 0.0
    %122 = vmatprep.subr.mxu0 0.0
    %123 = vmatpush1.msra.mxu0 0.0
    %124 = vmatprep.subr.mxu0 0.0
    %125 = vmatpush1.msra.mxu0 0.0
    %126 = vmatprep.subr.mxu0 0.0
    %127 = vmatpush1.msra.mxu0 0.0
    %128 = vmatprep.subr.mxu0 0.0
    %129 = vmatpush1.msra.mxu0 0.0
    %130 = vmatprep.subr.mxu0 0.0
    %131 = vmatpush1.msra.mxu0 0.0
    %132 = vmatprep.subr.mxu0 0.0
    %133 = vmatpush1.msra.mxu0 %v25
    %134 = vmatprep.subr.mxu0 0.0
    %135 = vmatpush1.msra.mxu0 %v24
    %136 = vmatprep.subr.mxu0 0.0
    %137 = vmatpush1.msra.mxu0 %v23
    %138 = vmatprep.subr.mxu0 0.0
    %139 = vmatpush1.msra.mxu0 %v22
    %140 = vmatprep.subr.mxu0 0.0
    %141 = vmatpush2.msra.mxu0 0.0
    %142 = vmatprep.subr.mxu0 0.0
    %143 = vmatpush2.msra.mxu0 0.0
    %144 = vmatprep.subr.mxu0 0.0
    %145 = vmatpush2.msra.mxu0 0.0
    %146 = vmatprep.subr.mxu0 0.0
    %147 = vmatpush2.msra.mxu0 0.0
    %148 = vmatprep.subr.mxu0 0.0
    %149 = vmatpush2.msra.mxu0 0.0
    %150 = vmatprep.subr.mxu0 0.0
    %151 = vmatpush2.msra.mxu0 0.0
    %152 = vmatprep.subr.mxu0 0.0
    %153 = vmatpush2.msra.mxu0 0.0
    %154 = vmatprep.subr.mxu0 0.0
    %155 = vmatpush2.msra.mxu0 0.0
    %156 = vmatprep.subr.mxu0 0.0
    %157 = vmatpush2.msra.mxu0 0.0
    %158 = vmatprep.subr.mxu0 0.0
    %159 = vmatpush2.msra.mxu0 0.0
    %160 = vmatprep.subr.mxu0 0.0
    %161 = vmatpush2.msra.mxu0 0.0
    %162 = vmatprep.subr.mxu0 0.0
    %163 = vmatpush2.msra.mxu0 0.0
    %164 = vmatprep.subr.mxu0 0.0
    %165 = vmatpush2.msra.mxu0 0.0
    %166 = vmatprep.subr.mxu0 0.0
    %167 = vmatpush2.msra.mxu0 0.0
    %168 = vmatprep.subr.mxu0 0.0
    %169 = vmatpush2.msra.mxu0 0.0
    %170 = vmatprep.subr.mxu0 0.0
    %171 = vmatpush2.msra.mxu0 0.0
    %172 = vmatprep.mubr.f32.mxu0 0.0
    %173 = vmatmul.mubr.f32.gmra.mxu0 %v106
    %v174 = vpop.f32.mrf.mxu0
    %v175 = vadd.f32 %v102, %v174
    %v176 = vpop.f32.mrf.mxu0
    %177 = vdwg.mxu0
    %v178 = vld [vmem:[%s4] sm:$0x1]
    %v180 = vlaneseq
    %v181 = vshrl.u32 %v180, 7
    %v182 = vsub.s32 0, %v181
    %v183 = vrot.slane %v178, %v182
    %v185 = vadd.f32 %v175, %v183
    %vm186 = vcmask 17408
    %187 = vst.msk [vmem:[#allocation2] sm:$0x3] %vm186, %v185
    // Predicated region
    $region22: #{tpu_custom_call.1} parent=1 // pred_check
      _
    $region23: #{tpu_custom_call.1} parent=1 // pred_check_branch
      %189 = sbr.rel (0) target = $region25
    $region24: #{tpu_custom_call.1} parent=1 // pred_region
      %s191 = ssub.s32 32, 32
      %192 = vsyncadd [#allocation3], %s191
      %s194 = sshll.u32 [#allocation2], 4
      %s195 = int_to_ptr.vmem [resolvable:$true] %s194
      %197 = dma.vmem_to_hbm [thread:$0]  %s195, 32, %s5, [#allocation3]
    $region25: #{tpu_custom_call.1} parent=1 // pred_fallthru
      _
    // Predicated region
    $region26: #{tpu_custom_call.1} parent=1 // pred_check
      _
    $region27: #{tpu_custom_call.1} parent=1 // pred_check_branch
      %199 = sbr.rel (0) target = $region29
    $region28: #{tpu_custom_call.1} parent=1 // pred_region
      %200 = dma.done [#allocation3], 32
    $region29: #{tpu_custom_call.1} parent=1 // pred_fallthru
      _
    %201 = vsyncpa [#allocation3], 1

</llo_original>
